<compile_context>
chip_gen: v7x
topology: tpu7x:2x2x1
jax: 0.10.0
libtpu: 0.0.40
codegen_flags: <defaults>
</compile_context>

<pallas_src>
import functools

import jax
import jax.numpy as jnp
from jax.experimental import pallas as pl
from jax.experimental.pallas import tpu as pltpu


# ----------------------------------------------------------------------------
# Small synthetic config (scaled-down, consistent with the module's forward).
# ----------------------------------------------------------------------------
CONFIG = dict(
    batch=2,
    in_chans=3,          # RGB image input
    img_size=16,         # small spatial size
    stem_chans=16,       # MobileNetV3-Small stem width
    n_features=64,       # stands in for backbone.classifier.in_features (1024)
    num_classes=512,     # stands in for 81313 landmark classes
)

_K_RAW = 3 * 3 * CONFIG["in_chans"]   # 27 im2col columns
_KP = 32                              # padded to 32 (zero rows in the weight)


def _hardswish(x):
    # Matches PyTorch hardswish: x * clip(x + 3, 0, 6) / 6
    return x * jnp.clip(x + 3.0, 0.0, 6.0) * (1.0 / 6.0)


# ----------------------------------------------------------------------------
# Fused Pallas kernel: stem conv -> GAP -> conv_head -> fc
# ----------------------------------------------------------------------------
def _fused_forward_kernel(patches_ref, stem_w_ref, stem_b_ref,
                          head_w_ref, head_b_ref, fc_w_ref, fc_b_ref,
                          o_ref, *, batch, hw):
    # ---- stem conv as im2col matmul + bias + hardswish (stays in VMEM) ----
    stem = jnp.dot(patches_ref[...], stem_w_ref[...],
                   preferred_element_type=jnp.float32)
    stem = _hardswish(stem + stem_b_ref[...])                # (batch*hw, Cstem)

    # ---- global average pool as an MXU matmul with a block-diagonal ----
    # (batch, batch*hw) averaging matrix: pooled[b] = mean over b's hw rows.
    m = batch * hw
    row = jax.lax.broadcasted_iota(jnp.int32, (batch, m), 0)
    col = jax.lax.broadcasted_iota(jnp.int32, (batch, m), 1)
    pool = jnp.where((col >= row * hw) & (col < (row + 1) * hw),
                     jnp.float32(1.0 / hw), jnp.float32(0.0))
    pooled = jnp.dot(pool, stem, preferred_element_type=jnp.float32)  # (batch, Cstem)

    # ---- conv_head projection (1x1 conv == linear) + hardswish ----
    feats = _hardswish(
        jnp.dot(pooled, head_w_ref[...], preferred_element_type=jnp.float32)
        + head_b_ref[...])                                   # (batch, n_features)

    # ---- fc classifier: one lane-dense tile of the logits ----
    logits = (jnp.dot(feats, fc_w_ref[...], preferred_element_type=jnp.float32)
              + fc_b_ref[...])
    o_ref[...] = logits.astype(o_ref.dtype)


def _pick_tn(n):
    """Widest lane-dense class tile that divides n (toy n=512 -> single block).

    At real num_classes, pad n to a multiple of a 256-aligned tile instead.
    """
    for cand in (2048, 1024, 512, 256, 128):
        if n % cand == 0:
            return cand
    return n


def fused_forward(patches, params, *, batch, hw):
    """patches: (batch*hw, Kp) f32 im2col of the stem conv. Returns logits."""
    m, kp = patches.shape
    cstem = params["stem_w"].shape[1]
    nf = params["head_w"].shape[1]
    nc = params["fc_w"].shape[1]
    tn = _pick_tn(nc)

    kernel = functools.partial(_fused_forward_kernel, batch=batch, hw=hw)
    return pl.pallas_call(
        kernel,
        out_shape=jax.ShapeDtypeStruct((batch, nc), jnp.float32),
        grid=(nc // tn,),
        in_specs=[
            pl.BlockSpec((m, kp), lambda j: (0, 0)),
            pl.BlockSpec((kp, cstem), lambda j: (0, 0)),
            pl.BlockSpec((1, cstem), lambda j: (0, 0)),
            pl.BlockSpec((cstem, nf), lambda j: (0, 0)),
            pl.BlockSpec((1, nf), lambda j: (0, 0)),
            pl.BlockSpec((nf, tn), lambda j: (0, j)),
            pl.BlockSpec((1, tn), lambda j: (0, j)),
        ],
        out_specs=pl.BlockSpec((batch, tn), lambda j: (0, j)),
        compiler_params=pltpu.CompilerParams(
            dimension_semantics=("parallel",)),
    )(patches,
      params["stem_w"], params["stem_b"].reshape(1, -1),
      params["head_w"], params["head_b"].reshape(1, -1),
      params["fc_w"], params["fc_b"].reshape(1, -1))


# ----------------------------------------------------------------------------
# Model: parameter init + forward
# ----------------------------------------------------------------------------
def init_params(key, cfg):
    k1, k2, k3, k4 = jax.random.split(key, 4)
    cin, cstem = cfg["in_chans"], cfg["stem_chans"]
    nf, nc = cfg["n_features"], cfg["num_classes"]

    # Stem conv 3x3 stride 2, stored as (KH*KW*Cin, Cout) for im2col, with the
    # K dim zero-padded 27 -> 32 (zero rows => numerically exact).
    # NOTE: real PyTorch weights are (Cout, Cin, KH, KW) and must be permuted
    # to (KH, KW, Cin, Cout) before flattening/padding.
    stem_w = jax.random.normal(k1, (3 * 3 * cin, cstem), jnp.float32) * 0.1
    stem_w = jnp.pad(stem_w, ((0, _KP - 3 * 3 * cin), (0, 0)))

    return {
        "stem_w": stem_w,
        "stem_b": jnp.zeros((cstem,), jnp.float32),
        # conv_head: GAP features -> n_features (1x1 conv == linear) + hardswish
        "head_w": jax.random.normal(k2, (cstem, nf), jnp.float32) * 0.1,
        "head_b": jnp.zeros((nf,), jnp.float32),
        # self.fc = nn.Linear(n_features, num_classes)
        "fc_w": jax.random.normal(k3, (nf, nc), jnp.float32) * 0.05,
        "fc_b": jax.random.normal(k4, (nc,), jnp.float32) * 0.01,
    }


def _im2col_3x3_s2(x_nhwc):
    """Extract 3x3 stride-2 patches (padding=1). Returns (B*Ho*Wo, 9*Cin)."""
    B, H, W, C = x_nhwc.shape
    Ho, Wo = H // 2, W // 2
    xp = jnp.pad(x_nhwc, ((0, 0), (1, 1), (1, 1), (0, 0)))
    cols = []
    for dy in range(3):
        for dx in range(3):
            cols.append(xp[:, dy:dy + 2 * Ho:2, dx:dx + 2 * Wo:2, :])
    patches = jnp.concatenate(cols, axis=-1)           # (B, Ho, Wo, 9*C)
    return patches.reshape(B * Ho * Wo, 9 * C), (B, Ho, Wo)


def landmark_retrieval_forward(x_nchw, params):
    """features = backbone(x); output = fc(features). One fused pallas_call."""
    x = jnp.transpose(x_nchw, (0, 2, 3, 1))            # NCHW -> NHWC
    patches, (B, Ho, Wo) = _im2col_3x3_s2(x)           # (B*Ho*Wo, 27)
    patches = jnp.pad(patches, ((0, 0), (0, _KP - patches.shape[1])))
    return fused_forward(patches, params, batch=B, hw=Ho * Wo)


# ----------------------------------------------------------------------------
# Driver
# ----------------------------------------------------------------------------
if __name__ == "__main__":
    cfg = CONFIG
    key = jax.random.PRNGKey(0)
    kx, kp = jax.random.split(key)

    x = jax.random.normal(
        kx, (cfg["batch"], cfg["in_chans"], cfg["img_size"], cfg["img_size"]),
        jnp.float32)                                    # NCHW, like PyTorch
    params = init_params(kp, cfg)

    fwd = jax.jit(landmark_retrieval_forward)
    out = fwd(x, params)
    jax.block_until_ready(out)

    assert out.shape == (cfg["batch"], cfg["num_classes"])
    assert out.dtype == jnp.float32
    assert bool(jnp.all(jnp.isfinite(out)))
    print("KERNEL_OK")
</pallas_src>

<mosaic_0001>
module attributes {stable_mosaic.version = 11 : i64} {
  func.func @_fused_forward_kernel(%arg0: i32, %arg1: memref<128x32xf32, #tpu.memory_space<vmem>>, %arg2: memref<32x16xf32, #tpu.memory_space<vmem>>, %arg3: memref<1x16xf32, #tpu.memory_space<vmem>>, %arg4: memref<16x64xf32, #tpu.memory_space<vmem>>, %arg5: memref<1x64xf32, #tpu.memory_space<vmem>>, %arg6: memref<64x512xf32, #tpu.memory_space<vmem>>, %arg7: memref<1x512xf32, #tpu.memory_space<vmem>>, %arg8: memref<2x512xf32, #tpu.memory_space<vmem>>) attributes {dimension_semantics = [#tpu.dimension_semantics<parallel>], iteration_bounds = array<i64: 1>, scalar_prefetch = 0 : i64, scratch_operands = 0 : i64, tpu.core_type = #tpu.core_type<tc>, window_params = [{pipeline_mode = #tpu.pipeline_mode<synchronous>, transform_indices = @transform_0, window_bounds = array<i64: 128, 32>}, {pipeline_mode = #tpu.pipeline_mode<synchronous>, transform_indices = @transform_1, window_bounds = array<i64: 32, 16>}, {pipeline_mode = #tpu.pipeline_mode<synchronous>, transform_indices = @transform_2, window_bounds = array<i64: 1, 16>}, {pipeline_mode = #tpu.pipeline_mode<synchronous>, transform_indices = @transform_3, window_bounds = array<i64: 16, 64>}, {pipeline_mode = #tpu.pipeline_mode<synchronous>, transform_indices = @transform_4, window_bounds = array<i64: 1, 64>}, {transform_indices = @transform_5, window_bounds = array<i64: 64, 512>}, {transform_indices = @transform_6, window_bounds = array<i64: 1, 512>}, {transform_indices = @transform_7, window_bounds = array<i64: 2, 512>}]} {
    %c0 = arith.constant 0 : index
    %c0_0 = arith.constant 0 : index
    %0 = vector.load %arg1[%c0, %c0_0] : memref<128x32xf32, #tpu.memory_space<vmem>>, vector<128x32xf32>
    %c0_1 = arith.constant 0 : index
    %c0_2 = arith.constant 0 : index
    %1 = vector.load %arg2[%c0_1, %c0_2] : memref<32x16xf32, #tpu.memory_space<vmem>>, vector<32x16xf32>
    %cst = arith.constant dense<0.000000e+00> : vector<128x16xf32>
    %2 = tpu.matmul %0, %1, %cst {dimension_numbers = #tpu.dot_dimension_numbers<[1], [0], [0], [1], [0, 0, 1, 1], [], []>} : vector<128x32xf32>, vector<32x16xf32>, vector<128x16xf32> -> vector<128x16xf32>
    %c0_3 = arith.constant 0 : index
    %c0_4 = arith.constant 0 : index
    %3 = vector.load %arg3[%c0_3, %c0_4] : memref<1x16xf32, #tpu.memory_space<vmem>>, vector<1x16xf32>
    %4 = vector.broadcast %3 : vector<1x16xf32> to vector<128x16xf32>
    %5 = arith.addf %2, %4 : vector<128x16xf32>
    %cst_5 = arith.constant 3.000000e+00 : f32
    %6 = vector.broadcast %cst_5 : f32 to vector<128x16xf32>
    %7 = arith.addf %5, %6 : vector<128x16xf32>
    %cst_6 = arith.constant 0.000000e+00 : f32
    %cst_7 = arith.constant 6.000000e+00 : f32
    %8 = vector.broadcast %cst_6 : f32 to vector<128x16xf32>
    %9 = arith.maximumf %8, %7 : vector<128x16xf32>
    %10 = vector.broadcast %cst_7 : f32 to vector<128x16xf32>
    %11 = arith.minimumf %10, %9 : vector<128x16xf32>
    %12 = arith.mulf %5, %11 : vector<128x16xf32>
    %cst_8 = arith.constant 0.166666672 : f32
    %13 = vector.broadcast %cst_8 : f32 to vector<128x16xf32>
    %14 = arith.mulf %12, %13 : vector<128x16xf32>
    %15 = tpu.iota {dimensions = array<i32: 0>} : vector<2x128xi32>
    %16 = tpu.iota {dimensions = array<i32: 1>} : vector<2x128xi32>
    %c64_i32 = arith.constant 64 : i32
    %17 = vector.broadcast %c64_i32 : i32 to vector<2x128xi32>
    %18 = arith.muli %15, %17 : vector<2x128xi32>
    %19 = arith.cmpi sge, %16, %18 : vector<2x128xi32>
    %c1_i32 = arith.constant 1 : i32
    %20 = vector.broadcast %c1_i32 : i32 to vector<2x128xi32>
    %21 = arith.addi %15, %20 : vector<2x128xi32>
    %c64_i32_9 = arith.constant 64 : i32
    %22 = vector.broadcast %c64_i32_9 : i32 to vector<2x128xi32>
    %23 = arith.muli %21, %22 : vector<2x128xi32>
    %24 = arith.cmpi slt, %16, %23 : vector<2x128xi32>
    %25 = arith.andi %19, %24 : vector<2x128xi1>
    %cst_10 = arith.constant 1.562500e-02 : f32
    %cst_11 = arith.constant 0.000000e+00 : f32
    %26 = vector.broadcast %cst_10 : f32 to vector<2x128xf32>
    %27 = vector.broadcast %cst_11 : f32 to vector<2x128xf32>
    %28 = arith.select %25, %26, %27 : vector<2x128xi1>, vector<2x128xf32>
    %cst_12 = arith.constant dense<0.000000e+00> : vector<2x16xf32>
    %29 = tpu.matmul %28, %14, %cst_12 {dimension_numbers = #tpu.dot_dimension_numbers<[1], [0], [0], [1], [0, 0, 1, 1], [], []>} : vector<2x128xf32>, vector<128x16xf32>, vector<2x16xf32> -> vector<2x16xf32>
    %c0_13 = arith.constant 0 : index
    %c0_14 = arith.constant 0 : index
    %30 = vector.load %arg4[%c0_13, %c0_14] : memref<16x64xf32, #tpu.memory_space<vmem>>, vector<16x64xf32>
    %cst_15 = arith.constant dense<0.000000e+00> : vector<2x64xf32>
    %31 = tpu.matmul %29, %30, %cst_15 {dimension_numbers = #tpu.dot_dimension_numbers<[1], [0], [0], [1], [0, 0, 1, 1], [], []>} : vector<2x16xf32>, vector<16x64xf32>, vector<2x64xf32> -> vector<2x64xf32>
    %c0_16 = arith.constant 0 : index
    %c0_17 = arith.constant 0 : index
    %32 = vector.load %arg5[%c0_16, %c0_17] : memref<1x64xf32, #tpu.memory_space<vmem>>, vector<1x64xf32>
    %33 = vector.broadcast %32 : vector<1x64xf32> to vector<2x64xf32>
    %34 = arith.addf %31, %33 : vector<2x64xf32>
    %cst_18 = arith.constant 3.000000e+00 : f32
    %35 = vector.broadcast %cst_18 : f32 to vector<2x64xf32>
    %36 = arith.addf %34, %35 : vector<2x64xf32>
    %cst_19 = arith.constant 0.000000e+00 : f32
    %cst_20 = arith.constant 6.000000e+00 : f32
    %37 = vector.broadcast %cst_19 : f32 to vector<2x64xf32>
    %38 = arith.maximumf %37, %36 : vector<2x64xf32>
    %39 = vector.broadcast %cst_20 : f32 to vector<2x64xf32>
    %40 = arith.minimumf %39, %38 : vector<2x64xf32>
    %41 = arith.mulf %34, %40 : vector<2x64xf32>
    %cst_21 = arith.constant 0.166666672 : f32
    %42 = vector.broadcast %cst_21 : f32 to vector<2x64xf32>
    %43 = arith.mulf %41, %42 : vector<2x64xf32>
    %c0_22 = arith.constant 0 : index
    %c0_23 = arith.constant 0 : index
    %44 = vector.load %arg6[%c0_22, %c0_23] : memref<64x512xf32, #tpu.memory_space<vmem>>, vector<64x512xf32>
    %cst_24 = arith.constant dense<0.000000e+00> : vector<2x512xf32>
    %45 = tpu.matmul %43, %44, %cst_24 {dimension_numbers = #tpu.dot_dimension_numbers<[1], [0], [0], [1], [0, 0, 1, 1], [], []>} : vector<2x64xf32>, vector<64x512xf32>, vector<2x512xf32> -> vector<2x512xf32>
    %c0_25 = arith.constant 0 : index
    %c0_26 = arith.constant 0 : index
    %46 = vector.load %arg7[%c0_25, %c0_26] : memref<1x512xf32, #tpu.memory_space<vmem>>, vector<1x512xf32>
    %47 = vector.broadcast %46 : vector<1x512xf32> to vector<2x512xf32>
    %48 = arith.addf %45, %47 : vector<2x512xf32>
    %c0_27 = arith.constant 0 : index
    %c0_28 = arith.constant 0 : index
    %49 = vector.load %arg8[%c0_27, %c0_28] : memref<2x512xf32, #tpu.memory_space<vmem>>, vector<2x512xf32>
    tpu.vector_store %arg8[%c0_27, %c0_28], %48 {strides = array<i32>} : memref<2x512xf32, #tpu.memory_space<vmem>>, vector<2x512xf32>,
    return
  }
  func.func @transform_0(%arg0: i32) -> (i32, i32) {
    %c0_i32 = arith.constant 0 : i32
    %c0_i32_0 = arith.constant 0 : i32
    %c0_i32_1 = arith.constant 0 : i32
    return %c0_i32, %c0_i32_0 : i32, i32
  }
  func.func @transform_1(%arg0: i32) -> (i32, i32) {
    %c0_i32 = arith.constant 0 : i32
    %c0_i32_0 = arith.constant 0 : i32
    %c0_i32_1 = arith.constant 0 : i32
    return %c0_i32, %c0_i32_0 : i32, i32
  }
  func.func @transform_2(%arg0: i32) -> (i32, i32) {
    %c0_i32 = arith.constant 0 : i32
    %c0_i32_0 = arith.constant 0 : i32
    %c0_i32_1 = arith.constant 0 : i32
    return %c0_i32, %c0_i32_0 : i32, i32
  }
  func.func @transform_3(%arg0: i32) -> (i32, i32) {
    %c0_i32 = arith.constant 0 : i32
    %c0_i32_0 = arith.constant 0 : i32
    %c0_i32_1 = arith.constant 0 : i32
    return %c0_i32, %c0_i32_0 : i32, i32
  }
  func.func @transform_4(%arg0: i32) -> (i32, i32) {
    %c0_i32 = arith.constant 0 : i32
    %c0_i32_0 = arith.constant 0 : i32
    %c0_i32_1 = arith.constant 0 : i32
    return %c0_i32, %c0_i32_0 : i32, i32
  }
  func.func @transform_5(%arg0: i32) -> (i32, i32) {
    %c0_i32 = arith.constant 0 : i32
    %c0_i32_0 = arith.constant 0 : i32
    return %c0_i32, %arg0 : i32, i32
  }
  func.func @transform_6(%arg0: i32) -> (i32, i32) {
    %c0_i32 = arith.constant 0 : i32
    %c0_i32_0 = arith.constant 0 : i32
    return %c0_i32, %arg0 : i32, i32
  }
  func.func @transform_7(%arg0: i32) -> (i32, i32) {
    %c0_i32 = arith.constant 0 : i32
    %c0_i32_0 = arith.constant 0 : i32
    return %c0_i32, %arg0 : i32, i32
  }
}

</mosaic_0001>

<llo_original>
// kernel: landmark_retrieval_forward.1
$region0: #{landmark_retrieval_forward.1}
  #allocation0 [shape = 'u32[]', space=smem, size = 0x4, offset = 0x4, fixed_abs, tag = 'smem constant byte address 0x4 - core index']
  #allocation1 [shape = 'u32[144,128]{1,0:T(1,128)}', space=vmem, size = 0x12000, scoped, tag = 'internal scratch']
  %s0 = inlined_call_operand.vmem [shape: f32[128,32], index: 0, kind: input, shape index: {}]
  %s1 = inlined_call_operand.vmem [shape: f32[32,16], index: 1, kind: input, shape index: {}]
  %s2 = inlined_call_operand.vmem [shape: f32[1,16], index: 2, kind: input, shape index: {}]
  %s3 = inlined_call_operand.vmem [shape: f32[16,64], index: 3, kind: input, shape index: {}]
  %s4 = inlined_call_operand.vmem [shape: f32[1,64], index: 4, kind: input, shape index: {}]
  %s5 = inlined_call_operand.vmem [shape: f32[64,512], index: 5, kind: input, shape index: {}]
  %s6 = inlined_call_operand.vmem [shape: f32[1,512], index: 6, kind: input, shape index: {}]
  %s7 = inlined_call_operand.hbm [shape: f32[2,512], index: 7, kind: output, shape index: {}]
  %s8 = sld [smem:[#allocation0]]
  $region38: #{landmark_retrieval_forward.1} parent=0
    _
  %s10 = ssub.s32 1, %s8
  %s11 = scalar_select 0, %s10, %s8
  $region1: #{landmark_retrieval_forward.1} parent=0
    #allocation2 [shape = 'u8[4096]{0}', space=vmem, size = 0x1000, scoped, tag = 'output window, operand 0, single buffered']
    #allocation3 [shape = 's32[1]{0}', space=sflag, size = 0x4, scoped, tag = 'scoped memory for landmark_retrieval_forward.1']
    %12 = vsyncpa [#allocation3], 0
    // Predicated region
    $region2: #{landmark_retrieval_forward.1} parent=1 // pred_check
      _
    $region3: #{landmark_retrieval_forward.1} parent=1 // pred_check_branch
      %14 = sbr.rel (0) target = $region5
    $region4: #{landmark_retrieval_forward.1} parent=1 // pred_region
      _
    $region5: #{landmark_retrieval_forward.1} parent=1 // pred_fallthru
      _
    // Predicated region
    $region6: #{landmark_retrieval_forward.1} parent=1 // pred_check
      _
    $region7: #{landmark_retrieval_forward.1} parent=1 // pred_check_branch
      %16 = sbr.rel (0) target = $region9
    $region8: #{landmark_retrieval_forward.1} parent=1 // pred_region
      _
    $region9: #{landmark_retrieval_forward.1} parent=1 // pred_fallthru
      _
    // Predicated region
    $region10: #{landmark_retrieval_forward.1} parent=1 // pred_check
      _
    $region11: #{landmark_retrieval_forward.1} parent=1 // pred_check_branch
      %18 = sbr.rel (0) target = $region13
    $region12: #{landmark_retrieval_forward.1} parent=1 // pred_region
      _
    $region13: #{landmark_retrieval_forward.1} parent=1 // pred_fallthru
      _
    // Predicated region
    $region14: #{landmark_retrieval_forward.1} parent=1 // pred_check
      _
    $region15: #{landmark_retrieval_forward.1} parent=1 // pred_check_branch
      %20 = sbr.rel (0) target = $region17
    $region16: #{landmark_retrieval_forward.1} parent=1 // pred_region
      _
    $region17: #{landmark_retrieval_forward.1} parent=1 // pred_fallthru
      _
    // Predicated region
    $region18: #{landmark_retrieval_forward.1} parent=1 // pred_check
      _
    $region19: #{landmark_retrieval_forward.1} parent=1 // pred_check_branch
      %22 = sbr.rel (0) target = $region21
    $region20: #{landmark_retrieval_forward.1} parent=1 // pred_region
      _
    $region21: #{landmark_retrieval_forward.1} parent=1 // pred_fallthru
      _
    // Predicated region
    $region22: #{landmark_retrieval_forward.1} parent=1 // pred_check
      _
    $region23: #{landmark_retrieval_forward.1} parent=1 // pred_check_branch
      %24 = sbr.rel (0) target = $region25
    $region24: #{landmark_retrieval_forward.1} parent=1 // pred_region
      _
    $region25: #{landmark_retrieval_forward.1} parent=1 // pred_fallthru
      _
    // Predicated region
    $region26: #{landmark_retrieval_forward.1} parent=1 // pred_check
      _
    $region27: #{landmark_retrieval_forward.1} parent=1 // pred_check_branch
      %26 = sbr.rel (0) target = $region29
    $region28: #{landmark_retrieval_forward.1} parent=1 // pred_region
      _
    $region29: #{landmark_retrieval_forward.1} parent=1 // pred_fallthru
      _
    %v27 = vld [vmem:[%s0] sm:$0xff]
    %v28 = vld [vmem:[%s0 + $0x8] sm:$0xff]
    %v29 = vld [vmem:[%s0 + $0x10] sm:$0xff]
    %v30 = vld [vmem:[%s0 + $0x18] sm:$0xff]
    %v31 = vld [vmem:[%s0 + $0x20] sm:$0xff]
    %v32 = vld [vmem:[%s0 + $0x28] sm:$0xff]
    %v33 = vld [vmem:[%s0 + $0x30] sm:$0xff]
    %v34 = vld [vmem:[%s0 + $0x38] sm:$0xff]
    %v35 = vld [vmem:[%s0 + $0x40] sm:$0xff]
    %v36 = vld [vmem:[%s0 + $0x48] sm:$0xff]
    %v37 = vld [vmem:[%s0 + $0x50] sm:$0xff]
    %v38 = vld [vmem:[%s0 + $0x58] sm:$0xff]
    %v39 = vld [vmem:[%s0 + $0x60] sm:$0xff]
    %v40 = vld [vmem:[%s0 + $0x68] sm:$0xff]
    %v41 = vld [vmem:[%s0 + $0x70] sm:$0xff]
    %v42 = vld [vmem:[%s0 + $0x78] sm:$0xff]
    %v43 = vld [vmem:[%s1] sm:$0xff]
    %v44 = vld [vmem:[%s1 + $0x8] sm:$0xff]
    %v45 = vld [vmem:[%s1 + $0x10] sm:$0xff]
    %v46 = vld [vmem:[%s1 + $0x18] sm:$0xff]
    %v47 = vld [vmem:[%s2] sm:$0x1]
    %v49 = vlaneseq
    %v50 = vshrl.u32 %v49, 7
    %v51 = vsub.s32 0, %v50
    %v52 = vrot.slane %v47, %v51
    %vm54 = vcmask 261120
    %v56 = vsel %vm54, %v27, 0
    %v59 = vsel %vm54, %v28, 0
    %v62 = vsel %vm54, %v29, 0
    %v65 = vsel %vm54, %v30, 0
    %v68 = vsel %vm54, %v31, 0
    %v71 = vsel %vm54, %v32, 0
    %v74 = vsel %vm54, %v33, 0
    %v77 = vsel %vm54, %v34, 0
    %v80 = vsel %vm54, %v35, 0
    %v83 = vsel %vm54, %v36, 0
    %v86 = vsel %vm54, %v37, 0
    %v89 = vsel %vm54, %v38, 0
    %v92 = vsel %vm54, %v39, 0
    %v95 = vsel %vm54, %v40, 0
    %v98 = vsel %vm54, %v41, 0
    %v101 = vsel %vm54, %v42, 0
    %103 = vmatprep.subr.mxu0 0.0
    %104 = vmatpush1.msra.mxu0 %v43
    %105 = vmatprep.subr.mxu0 0.0
    %106 = vmatpush1.msra.mxu0 %v44
    %107 = vmatprep.subr.mxu0 0.0
    %108 = vmatpush1.msra.mxu0 %v45
    %109 = vmatprep.subr.mxu0 0.0
    %110 = vmatpush1.msra.mxu0 %v46
    %111 = vmatprep.subr.mxu0 0.0
    %112 = vmatpush1.msra.mxu0 0.0
    %113 = vmatprep.subr.mxu0 0.0
    %114 = vmatpush1.msra.mxu0 0.0
    %115 = vmatprep.subr.mxu0 0.0
    %116 = vmatpush1.msra.mxu0 0.0
    %117 = vmatprep.subr.mxu0 0.0
    %118 = vmatpush1.msra.mxu0 0.0
    %119 = vmatprep.subr.mxu0 0.0
    %120 = vmatpush1.msra.mxu0 0.0
    %121 = vmatprep.subr.mxu0 0.0
    %122 = vmatpush1.msra.mxu0 0.0
    %123 = vmatprep.subr.mxu0 0.0
    %124 = vmatpush1.msra.mxu0 0.0
    %125 = vmatprep.subr.mxu0 0.0
    %126 = vmatpush1.msra.mxu0 0.0
    %127 = vmatprep.subr.mxu0 0.0
    %128 = vmatpush1.msra.mxu0 0.0
    %129 = vmatprep.subr.mxu0 0.0
    %130 = vmatpush1.msra.mxu0 0.0
    %131 = vmatprep.subr.mxu0 0.0
    %132 = vmatpush1.msra.mxu0 0.0
    %133 = vmatprep.subr.mxu0 0.0
    %134 = vmatpush1.msra.mxu0 0.0
    %135 = vmatprep.subr.mxu0 0.0
    %136 = vmatpush1.msra.mxu0 0.0
    %137 = vmatprep.subr.mxu0 0.0
    %138 = vmatpush1.msra.mxu0 0.0
    %139 = vmatprep.subr.mxu0 0.0
    %140 = vmatpush1.msra.mxu0 0.0
    %141 = vmatprep.subr.mxu0 0.0
    %142 = vmatpush1.msra.mxu0 0.0
    %143 = vmatprep.subr.mxu0 0.0
    %144 = vmatpush1.msra.mxu0 0.0
    %145 = vmatprep.subr.mxu0 0.0
    %146 = vmatpush1.msra.mxu0 0.0
    %147 = vmatprep.subr.mxu0 0.0
    %148 = vmatpush1.msra.mxu0 0.0
    %149 = vmatprep.subr.mxu0 0.0
    %150 = vmatpush1.msra.mxu0 0.0
    %151 = vmatprep.subr.mxu0 0.0
    %152 = vmatpush1.msra.mxu0 0.0
    %153 = vmatprep.subr.mxu0 0.0
    %154 = vmatpush1.msra.mxu0 0.0
    %155 = vmatprep.subr.mxu0 0.0
    %156 = vmatpush1.msra.mxu0 0.0
    %157 = vmatprep.subr.mxu0 0.0
    %158 = vmatpush1.msra.mxu0 0.0
    %159 = vmatprep.subr.mxu0 0.0
    %160 = vmatpush1.msra.mxu0 0.0
    %161 = vmatprep.subr.mxu0 0.0
    %162 = vmatpush1.msra.mxu0 0.0
    %163 = vmatprep.subr.mxu0 0.0
    %164 = vmatpush1.msra.mxu0 0.0
    %165 = vmatprep.subr.mxu0 0.0
    %166 = vmatpush1.msra.mxu0 0.0
    %167 = vmatprep.mubr.f32.mxu0 0.0
    %168 = vmatmul.mubr.f32.gmra.mrb[0].mxu0 %v56
    %v169 = vpop.f32.mrb[0].mxu0
    %v170 = vadd.f32 %v52, %v169
    %v171 = vpop.f32.mrb[0].mxu0
    %172 = vmatprep.mubr.f32.mxu0 0.0
    %173 = vmatmul.mubr.f32.gmra.mrb[0].mxu0 %v59
    %v174 = vpop.f32.mrb[0].mxu0
    %v175 = vadd.f32 %v52, %v174
    %v176 = vpop.f32.mrb[0].mxu0
    %177 = vmatprep.mubr.f32.mxu0 0.0
    %178 = vmatmul.mubr.f32.gmra.mrb[0].mxu0 %v62
    %v179 = vpop.f32.mrb[0].mxu0
    %v180 = vadd.f32 %v52, %v179
    %v181 = vpop.f32.mrb[0].mxu0
    %182 = vmatprep.mubr.f32.mxu0 0.0
    %183 = vmatmul.mubr.f32.gmra.mrb[0].mxu0 %v65
    %v184 = vpop.f32.mrb[0].mxu0
    %v185 = vadd.f32 %v52, %v184
    %v186 = vpop.f32.mrb[0].mxu0
    %187 = vmatprep.mubr.f32.mxu0 0.0
    %188 = vmatmul.mubr.f32.gmra.mrb[0].mxu0 %v68
    %v189 = vpop.f32.mrb[0].mxu0
    %v190 = vadd.f32 %v52, %v189
    %v191 = vpop.f32.mrb[0].mxu0
    %192 = vmatprep.mubr.f32.mxu0 0.0
    %193 = vmatmul.mubr.f32.gmra.mrb[0].mxu0 %v71
    %v194 = vpop.f32.mrb[0].mxu0
    %v195 = vadd.f32 %v52, %v194
    %v196 = vpop.f32.mrb[0].mxu0
    %197 = vmatprep.mubr.f32.mxu0 0.0
    %198 = vmatmul.mubr.f32.gmra.mrb[0].mxu0 %v74
    %v199 = vpop.f32.mrb[0].mxu0
    %v200 = vadd.f32 %v52, %v199
    %v201 = vpop.f32.mrb[0].mxu0
    %202 = vmatprep.mubr.f32.mxu0 0.0
    %203 = vmatmul.mubr.f32.gmra.mrb[0].mxu0 %v77
    %v204 = vpop.f32.mrb[0].mxu0
    %v205 = vadd.f32 %v52, %v204
    %v206 = vpop.f32.mrb[0].mxu0
    %207 = vmatprep.mubr.f32.mxu0 0.0
    %208 = vmatmul.mubr.f32.gmra.mrb[0].mxu0 %v80
    %v209 = vpop.f32.mrb[0].mxu0
    %v210 = vadd.f32 %v52, %v209
    %v211 = vpop.f32.mrb[0].mxu0
    %212 = vmatprep.mubr.f32.mxu0 0.0
    %213 = vmatmul.mubr.f32.gmra.mrb[0].mxu0 %v83
    %v214 = vpop.f32.mrb[0].mxu0
    %v215 = vadd.f32 %v52, %v214
    %v216 = vpop.f32.mrb[0].mxu0
    %217 = vmatprep.mubr.f32.mxu0 0.0
    %218 = vmatmul.mubr.f32.gmra.mrb[0].mxu0 %v86
    %v219 = vpop.f32.mrb[0].mxu0
    %v220 = vadd.f32 %v52, %v219
    %v221 = vpop.f32.mrb[0].mxu0
    %222 = vmatprep.mubr.f32.mxu0 0.0
    %223 = vmatmul.mubr.f32.gmra.mrb[0].mxu0 %v89
    %v224 = vpop.f32.mrb[0].mxu0
    %v225 = vadd.f32 %v52, %v224
    %v226 = vpop.f32.mrb[0].mxu0
    %227 = vmatprep.mubr.f32.mxu0 0.0
    %228 = vmatmul.mubr.f32.gmra.mrb[0].mxu0 %v92
    %v229 = vpop.f32.mrb[0].mxu0
    %v230 = vadd.f32 %v52, %v229
    %v231 = vpop.f32.mrb[0].mxu0
    %232 = vmatprep.mubr.f32.mxu0 0.0
    %233 = vmatmul.mubr.f32.gmra.mrb[0].mxu0 %v95
    %v234 = vpop.f32.mrb[0].mxu0
    %v235 = vadd.f32 %v52, %v234
    %v236 = vpop.f32.mrb[0].mxu0
    %237 = vmatprep.mubr.f32.mxu0 0.0
    %238 = vmatmul.mubr.f32.gmra.mrb[0].mxu0 %v98
    %v239 = vpop.f32.mrb[0].mxu0
    %v240 = vadd.f32 %v52, %v239
    %v241 = vpop.f32.mrb[0].mxu0
    %242 = vmatprep.mubr.f32.mxu0 0.0
    %243 = vmatmul.mubr.f32.gmra.mrb[0].mxu0 %v101
    %v244 = vpop.f32.mrb[0].mxu0
    %v245 = vadd.f32 %v52, %v244
    %v246 = vpop.f32.mrb[0].mxu0
    %247 = vdwg.mxu0
    %v248 = vadd.f32 %v170, 3.0
    %v249 = vadd.f32 %v175, 3.0
    %v250 = vadd.f32 %v180, 3.0
    %v251 = vadd.f32 %v185, 3.0
    %v252 = vadd.f32 %v190, 3.0
    %v253 = vadd.f32 %v195, 3.0
    %v254 = vadd.f32 %v200, 3.0
    %v255 = vadd.f32 %v205, 3.0
    %v256 = vadd.f32 %v210, 3.0
    %v257 = vadd.f32 %v215, 3.0
    %v258 = vadd.f32 %v220, 3.0
    %v259 = vadd.f32 %v225, 3.0
    %v260 = vadd.f32 %v230, 3.0
    %v261 = vadd.f32 %v235, 3.0
    %v262 = vadd.f32 %v240, 3.0
    %v263 = vadd.f32 %v245, 3.0
    %v264 = vmax.f32 %v248, 0.0
    %v265 = vmax.f32 %v249, 0.0
    %v266 = vmax.f32 %v250, 0.0
    %v267 = vmax.f32 %v251, 0.0
    %v268 = vmax.f32 %v252, 0.0
    %v269 = vmax.f32 %v253, 0.0
    %v270 = vmax.f32 %v254, 0.0
    %v271 = vmax.f32 %v255, 0.0
    %v272 = vmax.f32 %v256, 0.0
    %v273 = vmax.f32 %v257, 0.0
    %v274 = vmax.f32 %v258, 0.0
    %v275 = vmax.f32 %v259, 0.0
    %v276 = vmax.f32 %v260, 0.0
    %v277 = vmax.f32 %v261, 0.0
    %v278 = vmax.f32 %v262, 0.0
    %v279 = vmax.f32 %v263, 0.0
    %v280 = vmin.f32 %v264, 6.0
    %v281 = vmin.f32 %v265, 6.0
    %v282 = vmin.f32 %v266, 6.0
    %v283 = vmin.f32 %v267, 6.0
    %v284 = vmin.f32 %v268, 6.0
    %v285 = vmin.f32 %v269, 6.0
    %v286 = vmin.f32 %v270, 6.0
    %v287 = vmin.f32 %v271, 6.0
    %v288 = vmin.f32 %v272, 6.0
    %v289 = vmin.f32 %v273, 6.0
    %v290 = vmin.f32 %v274, 6.0
    %v291 = vmin.f32 %v275, 6.0
    %v292 = vmin.f32 %v276, 6.0
    %v293 = vmin.f32 %v277, 6.0
    %v294 = vmin.f32 %v278, 6.0
    %v295 = vmin.f32 %v279, 6.0
    %v296 = vmul.f32 %v170, %v280
    %v297 = vmul.f32 %v175, %v281
    %v298 = vmul.f32 %v180, %v282
    %v299 = vmul.f32 %v185, %v283
    %v300 = vmul.f32 %v190, %v284
    %v301 = vmul.f32 %v195, %v285
    %v302 = vmul.f32 %v200, %v286
    %v303 = vmul.f32 %v205, %v287
    %v304 = vmul.f32 %v210, %v288
    %v305 = vmul.f32 %v215, %v289
    %v306 = vmul.f32 %v220, %v290
    %v307 = vmul.f32 %v225, %v291
    %v308 = vmul.f32 %v230, %v292
    %v309 = vmul.f32 %v235, %v293
    %v310 = vmul.f32 %v240, %v294
    %v311 = vmul.f32 %v245, %v295
    %v312 = vmul.f32 %v296, 0.16666667
    %v313 = vmul.f32 %v297, 0.16666667
    %v314 = vmul.f32 %v298, 0.16666667
    %v315 = vmul.f32 %v299, 0.16666667
    %v316 = vmul.f32 %v300, 0.16666667
    %v317 = vmul.f32 %v301, 0.16666667
    %v318 = vmul.f32 %v302, 0.16666667
    %v319 = vmul.f32 %v303, 0.16666667
    %v320 = vmul.f32 %v304, 0.16666667
    %v321 = vmul.f32 %v305, 0.16666667
    %v322 = vmul.f32 %v306, 0.16666667
    %v323 = vmul.f32 %v307, 0.16666667
    %v324 = vmul.f32 %v308, 0.16666667
    %v325 = vmul.f32 %v309, 0.16666667
    %v326 = vmul.f32 %v310, 0.16666667
    %v327 = vmul.f32 %v311, 0.16666667
    %v328 = vlaneseq
    %v329 = vshrl.u32 %v328, 7
    %v330 = vlaneseq
    %v331 = vand.u32 %v330, 127
    %v332 = vmul.u32 %v329, 64
    %vm333 = vcmp.ge.s32.totalorder %v331, %v332
    %v334 = vadd.s32 %v329, 1
    %v335 = vmul.u32 %v334, 64
    %vm336 = vcmp.lt.s32.totalorder %v331, %v335
    %vm337 = vmand %vm333, %vm336
    %v338 = vsel %vm337, 0.015625, 0.0
    %339 = vmatprep.subr.mxu0 0.0
    %340 = vmatpush1.msra.mxu0 %v312
    %341 = vmatprep.subr.mxu0 0.0
    %342 = vmatpush1.msra.mxu0 %v313
    %343 = vmatprep.subr.mxu0 0.0
    %344 = vmatpush1.msra.mxu0 %v314
    %345 = vmatprep.subr.mxu0 0.0
    %346 = vmatpush1.msra.mxu0 %v315
    %347 = vmatprep.subr.mxu0 0.0
    %348 = vmatpush1.msra.mxu0 %v316
    %349 = vmatprep.subr.mxu0 0.0
    %350 = vmatpush1.msra.mxu0 %v317
    %351 = vmatprep.subr.mxu0 0.0
    %352 = vmatpush1.msra.mxu0 %v318
    %353 = vmatprep.subr.mxu0 0.0
    %354 = vmatpush1.msra.mxu0 %v319
    %355 = vmatprep.subr.mxu0 0.0
    %356 = vmatpush1.msra.mxu0 %v320
    %357 = vmatprep.subr.mxu0 0.0
    %358 = vmatpush1.msra.mxu0 %v321
    %359 = vmatprep.subr.mxu0 0.0
    %360 = vmatpush1.msra.mxu0 %v322
    %361 = vmatprep.subr.mxu0 0.0
    %362 = vmatpush1.msra.mxu0 %v323
    %363 = vmatprep.subr.mxu0 0.0
    %364 = vmatpush1.msra.mxu0 %v324
    %365 = vmatprep.subr.mxu0 0.0
    %366 = vmatpush1.msra.mxu0 %v325
    %367 = vmatprep.subr.mxu0 0.0
    %368 = vmatpush1.msra.mxu0 %v326
    %369 = vmatprep.subr.mxu0 0.0
    %370 = vmatpush1.msra.mxu0 %v327
    %371 = vmatprep.subr.mxu0 0.0
    %372 = vmatpush1.msra.mxu0 0.0
    %373 = vmatprep.subr.mxu0 0.0
    %374 = vmatpush1.msra.mxu0 0.0
    %375 = vmatprep.subr.mxu0 0.0
    %376 = vmatpush1.msra.mxu0 0.0
    %377 = vmatprep.subr.mxu0 0.0
    %378 = vmatpush1.msra.mxu0 0.0
    %379 = vmatprep.subr.mxu0 0.0
    %380 = vmatpush1.msra.mxu0 0.0
    %381 = vmatprep.subr.mxu0 0.0
    %382 = vmatpush1.msra.mxu0 0.0
    %383 = vmatprep.subr.mxu0 0.0
    %384 = vmatpush1.msra.mxu0 0.0
    %385 = vmatprep.subr.mxu0 0.0
    %386 = vmatpush1.msra.mxu0 0.0
    %387 = vmatprep.subr.mxu0 0.0
    %388 = vmatpush1.msra.mxu0 0.0
    %389 = vmatprep.subr.mxu0 0.0
    %390 = vmatpush1.msra.mxu0 0.0
    %391 = vmatprep.subr.mxu0 0.0
    %392 = vmatpush1.msra.mxu0 0.0
    %393 = vmatprep.subr.mxu0 0.0
    %394 = vmatpush1.msra.mxu0 0.0
    %395 = vmatprep.subr.mxu0 0.0
    %396 = vmatpush1.msra.mxu0 0.0
    %397 = vmatprep.subr.mxu0 0.0
    %398 = vmatpush1.msra.mxu0 0.0
    %399 = vmatprep.subr.mxu0 0.0
    %400 = vmatpush1.msra.mxu0 0.0
    %401 = vmatprep.subr.mxu0 0.0
    %402 = vmatpush1.msra.mxu0 0.0
    %403 = vmatprep.mubr.f32.mxu0 0.0
    %404 = vmatmul.mubr.f32.gmra.mrb[0].mxu0 %v338
    %v405 = vpop.f32.mrb[0].mxu0
    %v406 = vadd.f32 0.0, %v405
    %v407 = vpop.f32.mrb[0].mxu0
    %408 = vdwg.mxu0
    %v409 = vld [vmem:[%s3] sm:$0xff]
    %v410 = vld [vmem:[%s3 + $0x8] sm:$0xff]
    %v411 = vld [vmem:[%s4] sm:$0x1]
    %v413 = vlaneseq
    %v414 = vshrl.u32 %v413, 7
    %v415 = vsub.s32 0, %v414
    %v416 = vrot.slane %v411, %v415
    %vm418 = vcmask 130048
    %v420 = vsel %vm418, %v406, 0
    %422 = vmatprep.subr.mxu0 0.0
    %423 = vmatpush1.msra.mxu0 %v409
    %424 = vmatprep.subr.mxu0 0.0
    %425 = vmatpush1.msra.mxu0 %v410
    %426 = vmatprep.subr.mxu0 0.0
    %427 = vmatpush1.msra.mxu0 0.0
    %428 = vmatprep.subr.mxu0 0.0
    %429 = vmatpush1.msra.mxu0 0.0
    %430 = vmatprep.subr.mxu0 0.0
    %431 = vmatpush1.msra.mxu0 0.0
    %432 = vmatprep.subr.mxu0 0.0
    %433 = vmatpush1.msra.mxu0 0.0
    %434 = vmatprep.subr.mxu0 0.0
    %435 = vmatpush1.msra.mxu0 0.0
    %436 = vmatprep.subr.mxu0 0.0
    %437 = vmatpush1.msra.mxu0 0.0
    %438 = vmatprep.subr.mxu0 0.0
    %439 = vmatpush1.msra.mxu0 0.0
    %440 = vmatprep.subr.mxu0 0.0
    %441 = vmatpush1.msra.mxu0 0.0
    %442 = vmatprep.subr.mxu0 0.0
    %443 = vmatpush1.msra.mxu0 0.0
    %444 = vmatprep.subr.mxu0 0.0
    %445 = vmatpush1.msra.mxu0 0.0
    %446 = vmatprep.subr.mxu0 0.0
    %447 = vmatpush1.msra.mxu0 0.0
    %448 = vmatprep.subr.mxu0 0.0
    %449 = vmatpush1.msra.mxu0 0.0
    %450 = vmatprep.subr.mxu0 0.0
    %451 = vmatpush1.msra.mxu0 0.0
    %452 = vmatprep.subr.mxu0 0.0
    %453 = vmatpush1.msra.mxu0 0.0
    %454 = vmatprep.subr.mxu0 0.0
    %455 = vmatpush1.msra.mxu0 0.0
    %456 = vmatprep.subr.mxu0 0.0
    %457 = vmatpush1.msra.mxu0 0.0
    %458 = vmatprep.subr.mxu0 0.0
    %459 = vmatpush1.msra.mxu0 0.0
    %460 = vmatprep.subr.mxu0 0.0
    %461 = vmatpush1.msra.mxu0 0.0
    %462 = vmatprep.subr.mxu0 0.0
    %463 = vmatpush1.msra.mxu0 0.0
    %464 = vmatprep.subr.mxu0 0.0
    %465 = vmatpush1.msra.mxu0 0.0
    %466 = vmatprep.subr.mxu0 0.0
    %467 = vmatpush1.msra.mxu0 0.0
    %468 = vmatprep.subr.mxu0 0.0
    %469 = vmatpush1.msra.mxu0 0.0
    %470 = vmatprep.subr.mxu0 0.0
    %471 = vmatpush1.msra.mxu0 0.0
    %472 = vmatprep.subr.mxu0 0.0
    %473 = vmatpush1.msra.mxu0 0.0
    %474 = vmatprep.subr.mxu0 0.0
    %475 = vmatpush1.msra.mxu0 0.0
    %476 = vmatprep.subr.mxu0 0.0
    %477 = vmatpush1.msra.mxu0 0.0
    %478 = vmatprep.subr.mxu0 0.0
    %479 = vmatpush1.msra.mxu0 0.0
    %480 = vmatprep.subr.mxu0 0.0
    %481 = vmatpush1.msra.mxu0 0.0
    %482 = vmatprep.subr.mxu0 0.0
    %483 = vmatpush1.msra.mxu0 0.0
    %484 = vmatprep.subr.mxu0 0.0
    %485 = vmatpush1.msra.mxu0 0.0
    %486 = vmatprep.mubr.f32.mxu0 0.0
    %487 = vmatmul.mubr.f32.gmra.mrb[0].mxu0 %v420
    %v488 = vpop.f32.mrb[0].mxu0
    %v489 = vadd.f32 %v416, %v488
    %v490 = vpop.f32.mrb[0].mxu0
    %491 = vdwg.mxu0
    %v492 = vadd.f32 %v489, 3.0
    %v493 = vmax.f32 %v492, 0.0
    %v494 = vmin.f32 %v493, 6.0
    %v495 = vmul.f32 %v489, %v494
    %v496 = vmul.f32 %v495, 0.16666667
    %v497 = vld [vmem:[%s5] sm:$0xff]
    %v498 = vld [vmem:[%s5 + $0x8] sm:$0xff]
    %v499 = vld [vmem:[%s5 + $0x10] sm:$0xff]
    %v500 = vld [vmem:[%s5 + $0x18] sm:$0xff]
    %v501 = vld [vmem:[%s5 + $0x20] sm:$0xff]
    %v502 = vld [vmem:[%s5 + $0x28] sm:$0xff]
    %v503 = vld [vmem:[%s5 + $0x30] sm:$0xff]
    %v504 = vld [vmem:[%s5 + $0x38] sm:$0xff]
    %v505 = vld [vmem:[%s5 + $0x40] sm:$0xff]
    %v506 = vld [vmem:[%s5 + $0x48] sm:$0xff]
    %v507 = vld [vmem:[%s5 + $0x50] sm:$0xff]
    %v508 = vld [vmem:[%s5 + $0x58] sm:$0xff]
    %v509 = vld [vmem:[%s5 + $0x60] sm:$0xff]
    %v510 = vld [vmem:[%s5 + $0x68] sm:$0xff]
    %v511 = vld [vmem:[%s5 + $0x70] sm:$0xff]
    %v512 = vld [vmem:[%s5 + $0x78] sm:$0xff]
    %v513 = vld [vmem:[%s5 + $0x80] sm:$0xff]
    %v514 = vld [vmem:[%s5 + $0x88] sm:$0xff]
    %v515 = vld [vmem:[%s5 + $0x90] sm:$0xff]
    %v516 = vld [vmem:[%s5 + $0x98] sm:$0xff]
    %v517 = vld [vmem:[%s5 + $0xa0] sm:$0xff]
    %v518 = vld [vmem:[%s5 + $0xa8] sm:$0xff]
    %v519 = vld [vmem:[%s5 + $0xb0] sm:$0xff]
    %v520 = vld [vmem:[%s5 + $0xb8] sm:$0xff]
    %v521 = vld [vmem:[%s5 + $0xc0] sm:$0xff]
    %v522 = vld [vmem:[%s5 + $0xc8] sm:$0xff]
    %v523 = vld [vmem:[%s5 + $0xd0] sm:$0xff]
    %v524 = vld [vmem:[%s5 + $0xd8] sm:$0xff]
    %v525 = vld [vmem:[%s5 + $0xe0] sm:$0xff]
    %v526 = vld [vmem:[%s5 + $0xe8] sm:$0xff]
    %v527 = vld [vmem:[%s5 + $0xf0] sm:$0xff]
    %v528 = vld [vmem:[%s5 + $0xf8] sm:$0xff]
    %v529 = vld [vmem:[%s6] sm:$0xf]
    %v531 = vlaneseq
    %v532 = vshrl.u32 %v531, 7
    %v533 = vsub.s32 0, %v532
    %v534 = vrot.slane %v529, %v533
    %v535 = vlaneseq
    %v536 = vshrl.u32 %v535, 7
    %v537 = vsub.s32 1, %v536
    %v538 = vrot.slane %v529, %v537
    %v539 = vlaneseq
    %v540 = vshrl.u32 %v539, 7
    %v541 = vsub.s32 2, %v540
    %v542 = vrot.slane %v529, %v541
    %v543 = vlaneseq
    %v544 = vshrl.u32 %v543, 7
    %v545 = vsub.s32 3, %v544
    %v546 = vrot.slane %v529, %v545
    %vm551 = vcmask 523264
    %v553 = vsel %vm551, %v496, 0
    %555 = vmatprep.subr.mxu0 %v498
    %556 = vmatpush1.msra.mxu0 %v497
    %557 = vmatprep.subr.mxu0 %v502
    %558 = vmatpush1.msra.mxu0 %v501
    %559 = vmatprep.subr.mxu0 %v506
    %560 = vmatpush1.msra.mxu0 %v505
    %561 = vmatprep.subr.mxu0 %v510
    %562 = vmatpush1.msra.mxu0 %v509
    %563 = vmatprep.subr.mxu0 %v514
    %564 = vmatpush1.msra.mxu0 %v513
    %565 = vmatprep.subr.mxu0 %v518
    %566 = vmatpush1.msra.mxu0 %v517
    %567 = vmatprep.subr.mxu0 %v522
    %568 = vmatpush1.msra.mxu0 %v521
    %569 = vmatprep.subr.mxu0 %v526
    %570 = vmatpush1.msra.mxu0 %v525
    %571 = vmatprep.subr.mxu0 0.0
    %572 = vmatpush1.msra.mxu0 0.0
    %573 = vmatprep.subr.mxu0 0.0
    %574 = vmatpush1.msra.mxu0 0.0
    %575 = vmatprep.subr.mxu0 0.0
    %576 = vmatpush1.msra.mxu0 0.0
    %577 = vmatprep.subr.mxu0 0.0
    %578 = vmatpush1.msra.mxu0 0.0
    %579 = vmatprep.subr.mxu0 0.0
    %580 = vmatpush1.msra.mxu0 0.0
    %581 = vmatprep.subr.mxu0 0.0
    %582 = vmatpush1.msra.mxu0 0.0
    %583 = vmatprep.subr.mxu0 0.0
    %584 = vmatpush1.msra.mxu0 0.0
    %585 = vmatprep.subr.mxu0 0.0
    %586 = vmatpush1.msra.mxu0 0.0
    %587 = vmatprep.subr.mxu0 0.0
    %588 = vmatpush1.msra.mxu0 0.0
    %589 = vmatprep.subr.mxu0 0.0
    %590 = vmatpush1.msra.mxu0 0.0
    %591 = vmatprep.subr.mxu0 0.0
    %592 = vmatpush1.msra.mxu0 0.0
    %593 = vmatprep.subr.mxu0 0.0
    %594 = vmatpush1.msra.mxu0 0.0
    %595 = vmatprep.subr.mxu0 0.0
    %596 = vmatpush1.msra.mxu0 0.0
    %597 = vmatprep.subr.mxu0 0.0
    %598 = vmatpush1.msra.mxu0 0.0
    %599 = vmatprep.subr.mxu0 0.0
    %600 = vmatpush1.msra.mxu0 0.0
    %601 = vmatprep.subr.mxu0 0.0
    %602 = vmatpush1.msra.mxu0 0.0
    %603 = vmatprep.subr.mxu0 0.0
    %604 = vmatpush1.msra.mxu0 0.0
    %605 = vmatprep.subr.mxu0 0.0
    %606 = vmatpush1.msra.mxu0 0.0
    %607 = vmatprep.subr.mxu0 0.0
    %608 = vmatpush1.msra.mxu0 0.0
    %609 = vmatprep.subr.mxu0 0.0
    %610 = vmatpush1.msra.mxu0 0.0
    %611 = vmatprep.subr.mxu0 0.0
    %612 = vmatpush1.msra.mxu0 0.0
    %613 = vmatprep.subr.mxu0 0.0
    %614 = vmatpush1.msra.mxu0 0.0
    %615 = vmatprep.subr.mxu0 0.0
    %616 = vmatpush1.msra.mxu0 0.0
    %617 = vmatprep.subr.mxu0 0.0
    %618 = vmatpush1.msra.mxu0 0.0
    %619 = vmatprep.mubr.f32.mxu0 0.0
    %620 = vmatmul.mubr.f32.gmra.mrb[0].mxu0 %v553
    %v621 = vpop.f32.mrb[0].mxu0
    %v622 = vadd.f32 %v534, %v621
    %v623 = vpop.f32.mrb[0].mxu0
    %v624 = vadd.f32 %v538, %v623
    %625 = vdwg.mxu0
    %626 = vmatprep.subr.mxu0 %v500
    %627 = vmatpush1.msra.mxu0 %v499
    %628 = vmatprep.subr.mxu0 %v504
    %629 = vmatpush1.msra.mxu0 %v503
    %630 = vmatprep.subr.mxu0 %v508
    %631 = vmatpush1.msra.mxu0 %v507
    %632 = vmatprep.subr.mxu0 %v512
    %633 = vmatpush1.msra.mxu0 %v511
    %634 = vmatprep.subr.mxu0 %v516
    %635 = vmatpush1.msra.mxu0 %v515
    %636 = vmatprep.subr.mxu0 %v520
    %637 = vmatpush1.msra.mxu0 %v519
    %638 = vmatprep.subr.mxu0 %v524
    %639 = vmatpush1.msra.mxu0 %v523
    %640 = vmatprep.subr.mxu0 %v528
    %641 = vmatpush1.msra.mxu0 %v527
    %642 = vmatprep.subr.mxu0 0.0
    %643 = vmatpush1.msra.mxu0 0.0
    %644 = vmatprep.subr.mxu0 0.0
    %645 = vmatpush1.msra.mxu0 0.0
    %646 = vmatprep.subr.mxu0 0.0
    %647 = vmatpush1.msra.mxu0 0.0
    %648 = vmatprep.subr.mxu0 0.0
    %649 = vmatpush1.msra.mxu0 0.0
    %650 = vmatprep.subr.mxu0 0.0
    %651 = vmatpush1.msra.mxu0 0.0
    %652 = vmatprep.subr.mxu0 0.0
    %653 = vmatpush1.msra.mxu0 0.0
    %654 = vmatprep.subr.mxu0 0.0
    %655 = vmatpush1.msra.mxu0 0.0
    %656 = vmatprep.subr.mxu0 0.0
    %657 = vmatpush1.msra.mxu0 0.0
    %658 = vmatprep.subr.mxu0 0.0
    %659 = vmatpush1.msra.mxu0 0.0
    %660 = vmatprep.subr.mxu0 0.0
    %661 = vmatpush1.msra.mxu0 0.0
    %662 = vmatprep.subr.mxu0 0.0
    %663 = vmatpush1.msra.mxu0 0.0
    %664 = vmatprep.subr.mxu0 0.0
    %665 = vmatpush1.msra.mxu0 0.0
    %666 = vmatprep.subr.mxu0 0.0
    %667 = vmatpush1.msra.mxu0 0.0
    %668 = vmatprep.subr.mxu0 0.0
    %669 = vmatpush1.msra.mxu0 0.0
    %670 = vmatprep.subr.mxu0 0.0
    %671 = vmatpush1.msra.mxu0 0.0
    %672 = vmatprep.subr.mxu0 0.0
    %673 = vmatpush1.msra.mxu0 0.0
    %674 = vmatprep.subr.mxu0 0.0
    %675 = vmatpush1.msra.mxu0 0.0
    %676 = vmatprep.subr.mxu0 0.0
    %677 = vmatpush1.msra.mxu0 0.0
    %678 = vmatprep.subr.mxu0 0.0
    %679 = vmatpush1.msra.mxu0 0.0
    %680 = vmatprep.subr.mxu0 0.0
    %681 = vmatpush1.msra.mxu0 0.0
    %682 = vmatprep.subr.mxu0 0.0
    %683 = vmatpush1.msra.mxu0 0.0
    %684 = vmatprep.subr.mxu0 0.0
    %685 = vmatpush1.msra.mxu0 0.0
    %686 = vmatprep.subr.mxu0 0.0
    %687 = vmatpush1.msra.mxu0 0.0
    %688 = vmatprep.subr.mxu0 0.0
    %689 = vmatpush1.msra.mxu0 0.0
    %690 = vmatprep.mubr.f32.mxu0 0.0
    %691 = vmatmul.mubr.f32.gmra.mrb[0].mxu0 %v553
    %v692 = vpop.f32.mrb[0].mxu0
    %v693 = vadd.f32 %v542, %v692
    %v694 = vpop.f32.mrb[0].mxu0
    %v695 = vadd.f32 %v546, %v694
    %696 = vdwg.mxu0
    %v701 = vcombine.low %v622, %v624
    %v702 = vcombine.low %v693, %v695
    %v704 = vunpack.c.l.s4 1983009808
    %v705 = vunpack.c.0.s8 %v704
    %v706 = vlaneseq
    %v707 = vshrl.u32 %v706, 7
    %v708 = vsub.s32 %v705, %v707
    %v709 = vrot.slane %v701, %v708
    %v711 = vunpack.c.l.s4 1983009808
    %v712 = vunpack.c.0.s8 %v711
    %v713 = vlaneseq
    %v714 = vshrl.u32 %v713, 7
    %v715 = vsub.s32 %v712, %v714
    %v716 = vrot.slane %v702, %v715
    %v717 = vcombine.low %v709, %v716
    %719 = vst [vmem:[#allocation2] sm:$0xff] %v717
    // Predicated region
    $region30: #{landmark_retrieval_forward.1} parent=1 // pred_check
      _
    $region31: #{landmark_retrieval_forward.1} parent=1 // pred_check_branch
      %721 = sbr.rel (0) target = $region33
    $region32: #{landmark_retrieval_forward.1} parent=1 // pred_region
      %s723 = ssub.s32 128, 128
      %724 = vsyncadd [#allocation3], %s723
      %s726 = sshll.u32 [#allocation2], 4
      %s727 = int_to_ptr.vmem [resolvable:$true] %s726
      %729 = dma.vmem_to_hbm [thread:$0]  %s727, 128, %s7, [#allocation3]
    $region33: #{landmark_retrieval_forward.1} parent=1 // pred_fallthru
      _
    // Predicated region
    $region34: #{landmark_retrieval_forward.1} parent=1 // pred_check
      _
    $region35: #{landmark_retrieval_forward.1} parent=1 // pred_check_branch
      %731 = sbr.rel (0) target = $region37
    $region36: #{landmark_retrieval_forward.1} parent=1 // pred_region
      %732 = dma.done [#allocation3], 128
    $region37: #{landmark_retrieval_forward.1} parent=1 // pred_fallthru
      _
    %733 = vsyncpa [#allocation3], 1

</llo_original>
